<compile_context>
chip_gen: v6e
topology: v6e:2x2x1
jax: 0.10.0
libtpu: 0.0.40
codegen_flags: <defaults>
</compile_context>

<pallas_src>
import jax
import jax.numpy as jnp
from jax import lax
from jax.experimental import pallas as pl
from jax.experimental.pallas import tpu as pltpu


def _reward_mlp_kernel(state_ref, action_ref, w1sT_ref, w1aT_ref, b1T_ref,
                       w2T_ref, b2T_ref, w3c_ref, b3_ref, o_ref):
    s = state_ref[...]     # (TM, Ds)  batch-major input tile
    a = action_ref[...]    # (TM, Da)
    # Contract the feature (last) dim of both operands -> batch lands on the lane axis.
    dn = (((1,), (1,)), ((), ()))
    h1T = (lax.dot_general(w1sT_ref[...], s, dn, preferred_element_type=jnp.float32)
           + lax.dot_general(w1aT_ref[...], a, dn, preferred_element_type=jnp.float32)
           + b1T_ref[...])                                            # (H1, TM) dense
    h1T = jnp.maximum(h1T, 0.0)
    h2T = jnp.dot(w2T_ref[...], h1T,
                  preferred_element_type=jnp.float32) + b2T_ref[...]  # (H2, TM) dense
    h2T = jnp.maximum(h2T, 0.0)
    # Final 16 -> 1 layer: elementwise mul + sublane reduce (keeps the MXU out of a
    # 1-wide matmul); b3 read as an SMEM scalar.
    o_ref[...] = (jnp.sum(w3c_ref[...] * h2T, axis=0, keepdims=True)
                  + b3_ref[0, 0])                                     # (1, TM) lane-dense


def _round_up(x, m):
    return ((x + m - 1) // m) * m


def reward_model_forward(state, action, params):
    """Equivalent of RewardModel.forward(state, action)."""
    if state.ndim == 1:
        state = state[None, :]
    if action.ndim == 1:
        action = action[None, :]
    state = state.astype(jnp.float32)
    action = action.astype(jnp.float32)

    w1, b1, w2, b2, w3, b3 = params
    B, Ds = state.shape
    Da = action.shape[1]
    H1 = w1.shape[1]
    H2 = w2.shape[1]

    # Pre-transposed (tiny) weights: fused concat via the w1 split + batch-in-lanes layout.
    w1sT = w1[:Ds].T              # (H1, Ds)
    w1aT = w1[Ds:].T              # (H1, Da)
    b1T = b1.reshape(1, H1).T     # (H1, 1)
    w2T = w2.T                    # (H2, H1)
    b2T = b2.reshape(1, H2).T     # (H2, 1)
    w3c = w3.reshape(H2, 1)       # (H2, 1)
    b3s = b3.reshape(1, 1)

    # Batch tiling.  Small batch: a single full-array block (block dims == array dims,
    # so no alignment requirement).  Large batch: 128-aligned TM (<= 4096), at least
    # two tiles so both v7x cores get work; the last input block may be partial and is
    # clipped by the pipeline (no jnp.pad copies of the inputs).
    if B <= 1024:
        TM, G = B, 1
    else:
        TM = min(4096, _round_up(-(-B // 2), 128))
        G = -(-B // TM)
    B_out = G * TM

    const = lambda i: (0, 0)  # weight/bias tiles: VMEM-resident across the whole grid

    out = pl.pallas_call(
        _reward_mlp_kernel,
        out_shape=jax.ShapeDtypeStruct((1, B_out), jnp.float32),
        grid=(G,),
        in_specs=[
            pl.BlockSpec((TM, Ds), lambda i: (i, 0)),   # state tile (streamed)
            pl.BlockSpec((TM, Da), lambda i: (i, 0)),   # action tile (streamed)
            pl.BlockSpec((H1, Ds), const),              # w1_s^T
            pl.BlockSpec((H1, Da), const),              # w1_a^T
            pl.BlockSpec((H1, 1), const),               # b1^T
            pl.BlockSpec((H2, H1), const),              # w2^T
            pl.BlockSpec((H2, 1), const),               # b2^T
            pl.BlockSpec((H2, 1), const),               # w3 (column)
            pl.BlockSpec((1, 1), const,
                         memory_space=pltpu.MemorySpace.SMEM),  # b3 scalar
        ],
        out_specs=pl.BlockSpec((1, TM), lambda i: (0, i)),      # lane-dense output row
        compiler_params=pltpu.CompilerParams(
            dimension_semantics=("parallel",),
        ),
    )(state, action, w1sT, w1aT, b1T, w2T, b2T, w3c, b3s)

    # Drop the garbage lanes past B (from the clipped last block) and restore (B, 1).
    return out[0, :B].reshape(B, 1)


def init_params(state_dim, action_dim, key):
    """Deterministic init mimicking nn.Linear's uniform(-1/sqrt(fan_in), 1/sqrt(fan_in))."""
    in_dim = state_dim + action_dim
    dims = [(in_dim, 32), (32, 16), (16, 1)]
    params = []
    for (fan_in, fan_out) in dims:
        key, kw, kb = jax.random.split(key, 3)
        bound = 1.0 / jnp.sqrt(jnp.float32(fan_in))
        w = jax.random.uniform(kw, (fan_in, fan_out), jnp.float32, -bound, bound)
        b = jax.random.uniform(kb, (1, fan_out), jnp.float32, -bound, bound)
        params += [w, b]
    return tuple(params)


def _reference(state, action, params):
    w1, b1, w2, b2, w3, b3 = params
    x = jnp.concatenate([state, action], axis=1)
    h = jnp.maximum(x @ w1 + b1, 0.0)
    h = jnp.maximum(h @ w2 + b2, 0.0)
    return h @ w3 + b3


if __name__ == "__main__":
    state_dim, action_dim = 8, 8
    key = jax.random.PRNGKey(0)
    key, ks, ka, kp = jax.random.split(key, 4)
    params = init_params(state_dim, action_dim, kp)

    ok = True

    # Small batch (matches the module's typical use): grid=1, full-array blocks.
    batch = 2
    state = jax.random.normal(ks, (batch, state_dim), jnp.float32)
    action = jax.random.normal(ka, (batch, action_dim), jnp.float32)
    out = reward_model_forward(state, action, params)
    jax.block_until_ready(out)
    ref = _reference(state, action, params)
    ok &= out.shape == (batch, 1)
    ok &= bool(jnp.allclose(out, ref, atol=1e-4, rtol=1e-4))

    # Larger ragged batch: exercises the multi-tile grid + clipped partial last block.
    key, ks2, ka2 = jax.random.split(key, 3)
    batch2 = 1050  # -> TM=640, grid=(2,), last input block partial (no jnp.pad)
    state2 = jax.random.normal(ks2, (batch2, state_dim), jnp.float32)
    action2 = jax.random.normal(ka2, (batch2, action_dim), jnp.float32)
    out2 = reward_model_forward(state2, action2, params)
    jax.block_until_ready(out2)
    ref2 = _reference(state2, action2, params)
    ok &= out2.shape == (batch2, 1)
    ok &= bool(jnp.allclose(out2, ref2, atol=1e-4, rtol=1e-4))

    assert ok
    print("KERNEL_OK")
</pallas_src>

<mosaic_0001>
module attributes {stable_mosaic.version = 11 : i64} {
  func.func @_reward_mlp_kernel(%arg0: i32, %arg1: memref<2x8xf32, #tpu.memory_space<vmem>>, %arg2: memref<2x8xf32, #tpu.memory_space<vmem>>, %arg3: memref<32x8xf32, #tpu.memory_space<vmem>>, %arg4: memref<32x8xf32, #tpu.memory_space<vmem>>, %arg5: memref<32x1xf32, #tpu.memory_space<vmem>>, %arg6: memref<16x32xf32, #tpu.memory_space<vmem>>, %arg7: memref<16x1xf32, #tpu.memory_space<vmem>>, %arg8: memref<16x1xf32, #tpu.memory_space<vmem>>, %arg9: memref<1x1xf32, #tpu.memory_space<smem>>, %arg10: memref<1x2xf32, #tpu.memory_space<vmem>>) attributes {dimension_semantics = [#tpu.dimension_semantics<parallel>], iteration_bounds = array<i64: 1>, scalar_prefetch = 0 : i64, scratch_operands = 0 : i64, tpu.core_type = #tpu.core_type<tc>, window_params = [{transform_indices = @transform_0, window_bounds = array<i64: 2, 8>}, {transform_indices = @transform_1, window_bounds = array<i64: 2, 8>}, {pipeline_mode = #tpu.pipeline_mode<synchronous>, transform_indices = @transform_2, window_bounds = array<i64: 32, 8>}, {pipeline_mode = #tpu.pipeline_mode<synchronous>, transform_indices = @transform_3, window_bounds = array<i64: 32, 8>}, {pipeline_mode = #tpu.pipeline_mode<synchronous>, transform_indices = @transform_4, window_bounds = array<i64: 32, 1>}, {pipeline_mode = #tpu.pipeline_mode<synchronous>, transform_indices = @transform_5, window_bounds = array<i64: 16, 32>}, {pipeline_mode = #tpu.pipeline_mode<synchronous>, transform_indices = @transform_6, window_bounds = array<i64: 16, 1>}, {pipeline_mode = #tpu.pipeline_mode<synchronous>, transform_indices = @transform_7, window_bounds = array<i64: 16, 1>}, {transform_indices = @transform_8, window_bounds = array<i64: 1, 1>}, {transform_indices = @transform_9, window_bounds = array<i64: 1, 2>}]} {
    %c0 = arith.constant 0 : index
    %c0_0 = arith.constant 0 : index
    %0 = vector.load %arg1[%c0, %c0_0] : memref<2x8xf32, #tpu.memory_space<vmem>>, vector<2x8xf32>
    %c0_1 = arith.constant 0 : index
    %c0_2 = arith.constant 0 : index
    %1 = vector.load %arg2[%c0_1, %c0_2] : memref<2x8xf32, #tpu.memory_space<vmem>>, vector<2x8xf32>
    %c0_3 = arith.constant 0 : index
    %c0_4 = arith.constant 0 : index
    %2 = vector.load %arg3[%c0_3, %c0_4] : memref<32x8xf32, #tpu.memory_space<vmem>>, vector<32x8xf32>
    %cst = arith.constant dense<0.000000e+00> : vector<32x2xf32>
    %3 = tpu.matmul %2, %0, %cst {dimension_numbers = #tpu.dot_dimension_numbers<[1], [1], [0], [0], [0, 0, 1, 0], [], []>} : vector<32x8xf32>, vector<2x8xf32>, vector<32x2xf32> -> vector<32x2xf32>
    %c0_5 = arith.constant 0 : index
    %c0_6 = arith.constant 0 : index
    %4 = vector.load %arg4[%c0_5, %c0_6] : memref<32x8xf32, #tpu.memory_space<vmem>>, vector<32x8xf32>
    %cst_7 = arith.constant dense<0.000000e+00> : vector<32x2xf32>
    %5 = tpu.matmul %4, %1, %cst_7 {dimension_numbers = #tpu.dot_dimension_numbers<[1], [1], [0], [0], [0, 0, 1, 0], [], []>} : vector<32x8xf32>, vector<2x8xf32>, vector<32x2xf32> -> vector<32x2xf32>
    %6 = arith.addf %3, %5 : vector<32x2xf32>
    %c0_8 = arith.constant 0 : index
    %c0_9 = arith.constant 0 : index
    %7 = vector.load %arg5[%c0_8, %c0_9] : memref<32x1xf32, #tpu.memory_space<vmem>>, vector<32x1xf32>
    %8 = vector.broadcast %7 : vector<32x1xf32> to vector<32x2xf32>
    %9 = arith.addf %6, %8 : vector<32x2xf32>
    %cst_10 = arith.constant 0.000000e+00 : f32
    %10 = vector.broadcast %cst_10 : f32 to vector<32x2xf32>
    %11 = arith.maximumf %9, %10 : vector<32x2xf32>
    %c0_11 = arith.constant 0 : index
    %c0_12 = arith.constant 0 : index
    %12 = vector.load %arg6[%c0_11, %c0_12] : memref<16x32xf32, #tpu.memory_space<vmem>>, vector<16x32xf32>
    %cst_13 = arith.constant dense<0.000000e+00> : vector<16x2xf32>
    %13 = tpu.matmul %12, %11, %cst_13 {dimension_numbers = #tpu.dot_dimension_numbers<[1], [0], [0], [1], [0, 0, 1, 1], [], []>} : vector<16x32xf32>, vector<32x2xf32>, vector<16x2xf32> -> vector<16x2xf32>
    %c0_14 = arith.constant 0 : index
    %c0_15 = arith.constant 0 : index
    %14 = vector.load %arg7[%c0_14, %c0_15] : memref<16x1xf32, #tpu.memory_space<vmem>>, vector<16x1xf32>
    %15 = vector.broadcast %14 : vector<16x1xf32> to vector<16x2xf32>
    %16 = arith.addf %13, %15 : vector<16x2xf32>
    %cst_16 = arith.constant 0.000000e+00 : f32
    %17 = vector.broadcast %cst_16 : f32 to vector<16x2xf32>
    %18 = arith.maximumf %16, %17 : vector<16x2xf32>
    %c0_17 = arith.constant 0 : index
    %c0_18 = arith.constant 0 : index
    %19 = vector.load %arg8[%c0_17, %c0_18] : memref<16x1xf32, #tpu.memory_space<vmem>>, vector<16x1xf32>
    %20 = vector.broadcast %19 : vector<16x1xf32> to vector<16x2xf32>
    %21 = arith.mulf %20, %18 : vector<16x2xf32>
    %cst_19 = arith.constant dense<0.000000e+00> : vector<2xf32>
    %22 = vector.multi_reduction <add>, %21, %cst_19 [0] : vector<16x2xf32> to vector<2xf32>
    %23 = vector.shape_cast %22 : vector<2xf32> to vector<1x2xf32>
    %c0_20 = arith.constant 0 : index
    %c0_21 = arith.constant 0 : index
    %24 = memref.load %arg9[%c0_20, %c0_21] : memref<1x1xf32, #tpu.memory_space<smem>>
    %25 = vector.broadcast %24 : f32 to vector<1x2xf32>
    %26 = arith.addf %23, %25 : vector<1x2xf32>
    %c0_22 = arith.constant 0 : index
    %c0_23 = arith.constant 0 : index
    %27 = vector.load %arg10[%c0_22, %c0_23] : memref<1x2xf32, #tpu.memory_space<vmem>>, vector<1x2xf32>
    tpu.vector_store %arg10[%c0_22, %c0_23], %26 {strides = array<i32>} : memref<1x2xf32, #tpu.memory_space<vmem>>, vector<1x2xf32>,
    return
  }
  func.func @transform_0(%arg0: i32) -> (i32, i32) {
    %c0_i32 = arith.constant 0 : i32
    %c0_i32_0 = arith.constant 0 : i32
    return %arg0, %c0_i32 : i32, i32
  }
  func.func @transform_1(%arg0: i32) -> (i32, i32) {
    %c0_i32 = arith.constant 0 : i32
    %c0_i32_0 = arith.constant 0 : i32
    return %arg0, %c0_i32 : i32, i32
  }
  func.func @transform_2(%arg0: i32) -> (i32, i32) {
    %c0_i32 = arith.constant 0 : i32
    %c0_i32_0 = arith.constant 0 : i32
    %c0_i32_1 = arith.constant 0 : i32
    return %c0_i32, %c0_i32_0 : i32, i32
  }
  func.func @transform_3(%arg0: i32) -> (i32, i32) {
    %c0_i32 = arith.constant 0 : i32
    %c0_i32_0 = arith.constant 0 : i32
    %c0_i32_1 = arith.constant 0 : i32
    return %c0_i32, %c0_i32_0 : i32, i32
  }
  func.func @transform_4(%arg0: i32) -> (i32, i32) {
    %c0_i32 = arith.constant 0 : i32
    %c0_i32_0 = arith.constant 0 : i32
    %c0_i32_1 = arith.constant 0 : i32
    return %c0_i32, %c0_i32_0 : i32, i32
  }
  func.func @transform_5(%arg0: i32) -> (i32, i32) {
    %c0_i32 = arith.constant 0 : i32
    %c0_i32_0 = arith.constant 0 : i32
    %c0_i32_1 = arith.constant 0 : i32
    return %c0_i32, %c0_i32_0 : i32, i32
  }
  func.func @transform_6(%arg0: i32) -> (i32, i32) {
    %c0_i32 = arith.constant 0 : i32
    %c0_i32_0 = arith.constant 0 : i32
    %c0_i32_1 = arith.constant 0 : i32
    return %c0_i32, %c0_i32_0 : i32, i32
  }
  func.func @transform_7(%arg0: i32) -> (i32, i32) {
    %c0_i32 = arith.constant 0 : i32
    %c0_i32_0 = arith.constant 0 : i32
    %c0_i32_1 = arith.constant 0 : i32
    return %c0_i32, %c0_i32_0 : i32, i32
  }
  func.func @transform_8(%arg0: i32) -> (i32, i32) {
    %c0_i32 = arith.constant 0 : i32
    %c0_i32_0 = arith.constant 0 : i32
    %c0_i32_1 = arith.constant 0 : i32
    return %c0_i32, %c0_i32_0 : i32, i32
  }
  func.func @transform_9(%arg0: i32) -> (i32, i32) {
    %c0_i32 = arith.constant 0 : i32
    %c0_i32_0 = arith.constant 0 : i32
    return %c0_i32, %arg0 : i32, i32
  }
}

</mosaic_0001>

<llo_original>
// kernel: tpu_custom_call.1
$region0: #{tpu_custom_call.1}
  #allocation0 [shape = 'u32[]', space=smem, size = 0x4, offset = 0x4, fixed_abs, tag = 'smem constant byte address 0x4 - core index']
  #allocation1 [shape = 'u32[144,128]{1,0:T(1,128)}', space=vmem, size = 0x12000, scoped, tag = 'internal scratch']
  #allocation2 [shape = 'f32[1,1]{1,0:T(1,128)S(6)}', space=smem, size = 0x200, scoped, tag = 'scoped memory for tpu_custom_call.1']
  %s0 = inlined_call_operand.vmem [shape: f32[2,8], index: 0, kind: input, shape index: {}]
  %s1 = inlined_call_operand.vmem [shape: f32[2,8], index: 1, kind: input, shape index: {}]
  %s2 = inlined_call_operand.vmem [shape: f32[32,8], index: 2, kind: input, shape index: {}]
  %s3 = inlined_call_operand.vmem [shape: f32[32,8], index: 3, kind: input, shape index: {}]
  %s4 = inlined_call_operand.vmem [shape: f32[32,1], index: 4, kind: input, shape index: {}]
  %s5 = inlined_call_operand.vmem [shape: f32[16,32], index: 5, kind: input, shape index: {}]
  %s6 = inlined_call_operand.vmem [shape: f32[16,1], index: 6, kind: input, shape index: {}]
  %s7 = inlined_call_operand.vmem [shape: f32[16,1], index: 7, kind: input, shape index: {}]
  %s8 = inlined_call_operand.<no memory space> [shape: f32[1,1], index: 8, kind: input, shape index: {}]
  %s9 = inlined_call_operand.hbm [shape: f32[1,2], index: 9, kind: output, shape index: {}]
  %s10 = sld [smem:[#allocation0]]
  $region46: #{tpu_custom_call.1} parent=0
    _
  %s12 = ssub.s32 1, %s10
  %s13 = scalar_select 0, %s12, %s10
  %14 = sst [smem:[#allocation2]] %s8
  $region1: #{tpu_custom_call.1} parent=0
    #allocation3 [shape = 'u8[512]{0}', space=vmem, size = 0x400, scoped, tag = 'output window, operand 0, single buffered']
    #allocation4 [shape = 's32[1]{0}', space=sflag, size = 0x4, scoped, tag = 'scoped memory for tpu_custom_call.1']
    %15 = vsyncpa [#allocation4], 0
    // Predicated region
    $region2: #{tpu_custom_call.1} parent=1 // pred_check
      _
    $region3: #{tpu_custom_call.1} parent=1 // pred_check_branch
      %17 = sbr.rel (0) target = $region5
    $region4: #{tpu_custom_call.1} parent=1 // pred_region
      _
    $region5: #{tpu_custom_call.1} parent=1 // pred_fallthru
      _
    // Predicated region
    $region6: #{tpu_custom_call.1} parent=1 // pred_check
      _
    $region7: #{tpu_custom_call.1} parent=1 // pred_check_branch
      %19 = sbr.rel (0) target = $region9
    $region8: #{tpu_custom_call.1} parent=1 // pred_region
      _
    $region9: #{tpu_custom_call.1} parent=1 // pred_fallthru
      _
    // Predicated region
    $region10: #{tpu_custom_call.1} parent=1 // pred_check
      _
    $region11: #{tpu_custom_call.1} parent=1 // pred_check_branch
      %21 = sbr.rel (0) target = $region13
    $region12: #{tpu_custom_call.1} parent=1 // pred_region
      _
    $region13: #{tpu_custom_call.1} parent=1 // pred_fallthru
      _
    // Predicated region
    $region14: #{tpu_custom_call.1} parent=1 // pred_check
      _
    $region15: #{tpu_custom_call.1} parent=1 // pred_check_branch
      %23 = sbr.rel (0) target = $region17
    $region16: #{tpu_custom_call.1} parent=1 // pred_region
      _
    $region17: #{tpu_custom_call.1} parent=1 // pred_fallthru
      _
    // Predicated region
    $region18: #{tpu_custom_call.1} parent=1 // pred_check
      _
    $region19: #{tpu_custom_call.1} parent=1 // pred_check_branch
      %25 = sbr.rel (0) target = $region21
    $region20: #{tpu_custom_call.1} parent=1 // pred_region
      _
    $region21: #{tpu_custom_call.1} parent=1 // pred_fallthru
      _
    // Predicated region
    $region22: #{tpu_custom_call.1} parent=1 // pred_check
      _
    $region23: #{tpu_custom_call.1} parent=1 // pred_check_branch
      %27 = sbr.rel (0) target = $region25
    $region24: #{tpu_custom_call.1} parent=1 // pred_region
      _
    $region25: #{tpu_custom_call.1} parent=1 // pred_fallthru
      _
    // Predicated region
    $region26: #{tpu_custom_call.1} parent=1 // pred_check
      _
    $region27: #{tpu_custom_call.1} parent=1 // pred_check_branch
      %29 = sbr.rel (0) target = $region29
    $region28: #{tpu_custom_call.1} parent=1 // pred_region
      _
    $region29: #{tpu_custom_call.1} parent=1 // pred_fallthru
      _
    // Predicated region
    $region30: #{tpu_custom_call.1} parent=1 // pred_check
      _
    $region31: #{tpu_custom_call.1} parent=1 // pred_check_branch
      %31 = sbr.rel (0) target = $region33
    $region32: #{tpu_custom_call.1} parent=1 // pred_region
      _
    $region33: #{tpu_custom_call.1} parent=1 // pred_fallthru
      _
    // Predicated region
    $region34: #{tpu_custom_call.1} parent=1 // pred_check
      _
    $region35: #{tpu_custom_call.1} parent=1 // pred_check_branch
      %33 = sbr.rel (0) target = $region37
    $region36: #{tpu_custom_call.1} parent=1 // pred_region
      _
    $region37: #{tpu_custom_call.1} parent=1 // pred_fallthru
      _
    %v34 = vld [vmem:[%s0] sm:$0x3]
    %v35 = vld [vmem:[%s1] sm:$0x3]
    %v36 = vld [vmem:[%s2] sm:$0xff]
    %v37 = vld [vmem:[%s2 + $0x8] sm:$0xff]
    %v38 = vld [vmem:[%s2 + $0x10] sm:$0xff]
    %v39 = vld [vmem:[%s2 + $0x18] sm:$0xff]
    %v40 = vld [vmem:[%s3] sm:$0xff]
    %v41 = vld [vmem:[%s3 + $0x8] sm:$0xff]
    %v42 = vld [vmem:[%s3 + $0x10] sm:$0xff]
    %v43 = vld [vmem:[%s3 + $0x18] sm:$0xff]
    %vm44 = vcmask 64512
    %v46 = vsel %vm44, %v40, 0
    %v49 = vsel %vm44, %v41, 0
    %v52 = vsel %vm44, %v42, 0
    %v55 = vsel %vm44, %v43, 0
    %v58 = vsel %vm44, %v35, 0
    %60 = vmatprep.subr.mxu0 0.0
    %61 = vmatpush1.xpose.msra.mxu0 0.0
    %62 = vmatprep.subr.mxu0 0.0
    %63 = vmatpush1.xpose.msra.mxu0 0.0
    %64 = vmatprep.subr.mxu0 0.0
    %65 = vmatpush1.xpose.msra.mxu0 0.0
    %66 = vmatprep.subr.mxu0 0.0
    %67 = vmatpush1.xpose.msra.mxu0 0.0
    %68 = vmatprep.subr.mxu0 0.0
    %69 = vmatpush1.xpose.msra.mxu0 0.0
    %70 = vmatprep.subr.mxu0 0.0
    %71 = vmatpush1.xpose.msra.mxu0 0.0
    %72 = vmatprep.subr.mxu0 0.0
    %73 = vmatpush1.xpose.msra.mxu0 0.0
    %74 = vmatprep.subr.mxu0 0.0
    %75 = vmatpush1.xpose.msra.mxu0 0.0
    %76 = vmatprep.subr.mxu0 0.0
    %77 = vmatpush1.xpose.msra.mxu0 0.0
    %78 = vmatprep.subr.mxu0 0.0
    %79 = vmatpush1.xpose.msra.mxu0 0.0
    %80 = vmatprep.subr.mxu0 0.0
    %81 = vmatpush1.xpose.msra.mxu0 0.0
    %82 = vmatprep.subr.mxu0 0.0
    %83 = vmatpush1.xpose.msra.mxu0 0.0
    %84 = vmatprep.subr.mxu0 0.0
    %85 = vmatpush1.xpose.msra.mxu0 0.0
    %86 = vmatprep.subr.mxu0 0.0
    %87 = vmatpush1.xpose.msra.mxu0 0.0
    %88 = vmatprep.subr.mxu0 0.0
    %89 = vmatpush1.xpose.msra.mxu0 0.0
    %90 = vmatprep.subr.mxu0 0.0
    %91 = vmatpush1.xpose.msra.mxu0 %v58
    %92 = vmatprep.subr.mxu0 0.0
    %93 = vmatpush2.xpose.msra.mxu0 0.0
    %94 = vmatprep.subr.mxu0 0.0
    %95 = vmatpush2.xpose.msra.mxu0 0.0
    %96 = vmatprep.subr.mxu0 0.0
    %97 = vmatpush2.xpose.msra.mxu0 0.0
    %98 = vmatprep.subr.mxu0 0.0
    %99 = vmatpush2.xpose.msra.mxu0 0.0
    %100 = vmatprep.subr.mxu0 0.0
    %101 = vmatpush2.xpose.msra.mxu0 0.0
    %102 = vmatprep.subr.mxu0 0.0
    %103 = vmatpush2.xpose.msra.mxu0 0.0
    %104 = vmatprep.subr.mxu0 0.0
    %105 = vmatpush2.xpose.msra.mxu0 0.0
    %106 = vmatprep.subr.mxu0 0.0
    %107 = vmatpush2.xpose.msra.mxu0 0.0
    %108 = vmatprep.subr.mxu0 0.0
    %109 = vmatpush2.xpose.msra.mxu0 0.0
    %110 = vmatprep.subr.mxu0 0.0
    %111 = vmatpush2.xpose.msra.mxu0 0.0
    %112 = vmatprep.subr.mxu0 0.0
    %113 = vmatpush2.xpose.msra.mxu0 0.0
    %114 = vmatprep.subr.mxu0 0.0
    %115 = vmatpush2.xpose.msra.mxu0 0.0
    %116 = vmatprep.subr.mxu0 0.0
    %117 = vmatpush2.xpose.msra.mxu0 0.0
    %118 = vmatprep.subr.mxu0 0.0
    %119 = vmatpush2.xpose.msra.mxu0 0.0
    %120 = vmatprep.subr.mxu0 0.0
    %121 = vmatpush2.xpose.msra.mxu0 0.0
    %122 = vmatprep.subr.mxu0 0.0
    %123 = vmatpush2.xpose.msra.mxu0 0.0
    %124 = vmatprep.mubr.f32.mxu0 0.0
    %125 = vmatmul.mubr.f32.gmra.mxu0 %v46
    %v126 = vpop.f32.mrf.mxu0
    %v127 = vadd.f32 0.0, %v126
    %v128 = vpop.f32.mrf.mxu0
    %129 = vmatprep.mubr.f32.mxu0 0.0
    %130 = vmatmul.mubr.f32.gmra.mxu0 %v49
    %v131 = vpop.f32.mrf.mxu0
    %v132 = vadd.f32 0.0, %v131
    %v133 = vpop.f32.mrf.mxu0
    %134 = vmatprep.mubr.f32.mxu0 0.0
    %135 = vmatmul.mubr.f32.gmra.mxu0 %v52
    %v136 = vpop.f32.mrf.mxu0
    %v137 = vadd.f32 0.0, %v136
    %v138 = vpop.f32.mrf.mxu0
    %139 = vmatprep.mubr.f32.mxu0 0.0
    %140 = vmatmul.mubr.f32.gmra.mxu0 %v55
    %v141 = vpop.f32.mrf.mxu0
    %v142 = vadd.f32 0.0, %v141
    %v143 = vpop.f32.mrf.mxu0
    %144 = vdwg.mxu0
    %v146 = vsel %vm44, %v36, 0
    %v149 = vsel %vm44, %v37, 0
    %v152 = vsel %vm44, %v38, 0
    %v155 = vsel %vm44, %v39, 0
    %v158 = vsel %vm44, %v34, 0
    %160 = vmatprep.subr.mxu0 0.0
    %161 = vmatpush1.xpose.msra.mxu0 0.0
    %162 = vmatprep.subr.mxu0 0.0
    %163 = vmatpush1.xpose.msra.mxu0 0.0
    %164 = vmatprep.subr.mxu0 0.0
    %165 = vmatpush1.xpose.msra.mxu0 0.0
    %166 = vmatprep.subr.mxu0 0.0
    %167 = vmatpush1.xpose.msra.mxu0 0.0
    %168 = vmatprep.subr.mxu0 0.0
    %169 = vmatpush1.xpose.msra.mxu0 0.0
    %170 = vmatprep.subr.mxu0 0.0
    %171 = vmatpush1.xpose.msra.mxu0 0.0
    %172 = vmatprep.subr.mxu0 0.0
    %173 = vmatpush1.xpose.msra.mxu0 0.0
    %174 = vmatprep.subr.mxu0 0.0
    %175 = vmatpush1.xpose.msra.mxu0 0.0
    %176 = vmatprep.subr.mxu0 0.0
    %177 = vmatpush1.xpose.msra.mxu0 0.0
    %178 = vmatprep.subr.mxu0 0.0
    %179 = vmatpush1.xpose.msra.mxu0 0.0
    %180 = vmatprep.subr.mxu0 0.0
    %181 = vmatpush1.xpose.msra.mxu0 0.0
    %182 = vmatprep.subr.mxu0 0.0
    %183 = vmatpush1.xpose.msra.mxu0 0.0
    %184 = vmatprep.subr.mxu0 0.0
    %185 = vmatpush1.xpose.msra.mxu0 0.0
    %186 = vmatprep.subr.mxu0 0.0
    %187 = vmatpush1.xpose.msra.mxu0 0.0
    %188 = vmatprep.subr.mxu0 0.0
    %189 = vmatpush1.xpose.msra.mxu0 0.0
    %190 = vmatprep.subr.mxu0 0.0
    %191 = vmatpush1.xpose.msra.mxu0 %v158
    %192 = vmatprep.subr.mxu0 0.0
    %193 = vmatpush2.xpose.msra.mxu0 0.0
    %194 = vmatprep.subr.mxu0 0.0
    %195 = vmatpush2.xpose.msra.mxu0 0.0
    %196 = vmatprep.subr.mxu0 0.0
    %197 = vmatpush2.xpose.msra.mxu0 0.0
    %198 = vmatprep.subr.mxu0 0.0
    %199 = vmatpush2.xpose.msra.mxu0 0.0
    %200 = vmatprep.subr.mxu0 0.0
    %201 = vmatpush2.xpose.msra.mxu0 0.0
    %202 = vmatprep.subr.mxu0 0.0
    %203 = vmatpush2.xpose.msra.mxu0 0.0
    %204 = vmatprep.subr.mxu0 0.0
    %205 = vmatpush2.xpose.msra.mxu0 0.0
    %206 = vmatprep.subr.mxu0 0.0
    %207 = vmatpush2.xpose.msra.mxu0 0.0
    %208 = vmatprep.subr.mxu0 0.0
    %209 = vmatpush2.xpose.msra.mxu0 0.0
    %210 = vmatprep.subr.mxu0 0.0
    %211 = vmatpush2.xpose.msra.mxu0 0.0
    %212 = vmatprep.subr.mxu0 0.0
    %213 = vmatpush2.xpose.msra.mxu0 0.0
    %214 = vmatprep.subr.mxu0 0.0
    %215 = vmatpush2.xpose.msra.mxu0 0.0
    %216 = vmatprep.subr.mxu0 0.0
    %217 = vmatpush2.xpose.msra.mxu0 0.0
    %218 = vmatprep.subr.mxu0 0.0
    %219 = vmatpush2.xpose.msra.mxu0 0.0
    %220 = vmatprep.subr.mxu0 0.0
    %221 = vmatpush2.xpose.msra.mxu0 0.0
    %222 = vmatprep.subr.mxu0 0.0
    %223 = vmatpush2.xpose.msra.mxu0 0.0
    %224 = vmatprep.mubr.f32.mxu0 0.0
    %225 = vmatmul.mubr.f32.gmra.mxu0 %v146
    %v226 = vpop.f32.mrf.mxu0
    %v227 = vadd.f32 %v127, %v226
    %v228 = vpop.f32.mrf.mxu0
    %229 = vmatprep.mubr.f32.mxu0 0.0
    %230 = vmatmul.mubr.f32.gmra.mxu0 %v149
    %v231 = vpop.f32.mrf.mxu0
    %v232 = vadd.f32 %v132, %v231
    %v233 = vpop.f32.mrf.mxu0
    %234 = vmatprep.mubr.f32.mxu0 0.0
    %235 = vmatmul.mubr.f32.gmra.mxu0 %v152
    %v236 = vpop.f32.mrf.mxu0
    %v237 = vadd.f32 %v137, %v236
    %v238 = vpop.f32.mrf.mxu0
    %239 = vmatprep.mubr.f32.mxu0 0.0
    %240 = vmatmul.mubr.f32.gmra.mxu0 %v155
    %v241 = vpop.f32.mrf.mxu0
    %v242 = vadd.f32 %v142, %v241
    %v243 = vpop.f32.mrf.mxu0
    %244 = vdwg.mxu0
    %v245 = vld [vmem:[%s4] sm:$0xff]
    %v246 = vld [vmem:[%s4 + $0x8] sm:$0xff]
    %v247 = vld [vmem:[%s4 + $0x10] sm:$0xff]
    %v248 = vld [vmem:[%s4 + $0x18] sm:$0xff]
    %250 = vset.pattern.permute.xlu0 0
    %251 = vperm.xlu0 %250, %v245
    %v252 = vpop.permute.xlu0 %251
    %255 = vset.pattern.permute.xlu0 0
    %256 = vperm.xlu0 %255, %v246
    %v257 = vpop.permute.xlu0 %256
    %260 = vset.pattern.permute.xlu0 0
    %261 = vperm.xlu0 %260, %v247
    %v262 = vpop.permute.xlu0 %261
    %265 = vset.pattern.permute.xlu0 0
    %266 = vperm.xlu0 %265, %v248
    %v267 = vpop.permute.xlu0 %266
    %v269 = vadd.f32 %v227, %v252
    %v270 = vadd.f32 %v232, %v257
    %v271 = vadd.f32 %v237, %v262
    %v272 = vadd.f32 %v242, %v267
    %v273 = vmax.f32 %v269, 0.0
    %v274 = vmax.f32 %v270, 0.0
    %v275 = vmax.f32 %v271, 0.0
    %v276 = vmax.f32 %v272, 0.0
    %v277 = vld [vmem:[%s5] sm:$0xff]
    %v278 = vld [vmem:[%s5 + $0x8] sm:$0xff]
    %v279 = vld [vmem:[%s6] sm:$0xff]
    %v280 = vld [vmem:[%s6 + $0x8] sm:$0xff]
    %282 = vset.pattern.permute.xlu0 0
    %283 = vperm.xlu0 %282, %v279
    %v284 = vpop.permute.xlu0 %283
    %287 = vset.pattern.permute.xlu0 0
    %288 = vperm.xlu0 %287, %v280
    %v289 = vpop.permute.xlu0 %288
    %vm291 = vcmask 261120
    %v293 = vsel %vm291, %v277, 0
    %v296 = vsel %vm291, %v278, 0
    %298 = vmatprep.subr.mxu0 0.0
    %299 = vmatpush1.msra.mxu0 0.0
    %300 = vmatprep.subr.mxu0 0.0
    %301 = vmatpush1.msra.mxu0 0.0
    %302 = vmatprep.subr.mxu0 0.0
    %303 = vmatpush1.msra.mxu0 0.0
    %304 = vmatprep.subr.mxu0 0.0
    %305 = vmatpush1.msra.mxu0 0.0
    %306 = vmatprep.subr.mxu0 0.0
    %307 = vmatpush1.msra.mxu0 0.0
    %308 = vmatprep.subr.mxu0 0.0
    %309 = vmatpush1.msra.mxu0 0.0
    %310 = vmatprep.subr.mxu0 0.0
    %311 = vmatpush1.msra.mxu0 0.0
    %312 = vmatprep.subr.mxu0 0.0
    %313 = vmatpush1.msra.mxu0 0.0
    %314 = vmatprep.subr.mxu0 0.0
    %315 = vmatpush1.msra.mxu0 0.0
    %316 = vmatprep.subr.mxu0 0.0
    %317 = vmatpush1.msra.mxu0 0.0
    %318 = vmatprep.subr.mxu0 0.0
    %319 = vmatpush1.msra.mxu0 0.0
    %320 = vmatprep.subr.mxu0 0.0
    %321 = vmatpush1.msra.mxu0 0.0
    %322 = vmatprep.subr.mxu0 0.0
    %323 = vmatpush1.msra.mxu0 %v276
    %324 = vmatprep.subr.mxu0 0.0
    %325 = vmatpush1.msra.mxu0 %v275
    %326 = vmatprep.subr.mxu0 0.0
    %327 = vmatpush1.msra.mxu0 %v274
    %328 = vmatprep.subr.mxu0 0.0
    %329 = vmatpush1.msra.mxu0 %v273
    %330 = vmatprep.subr.mxu0 0.0
    %331 = vmatpush2.msra.mxu0 0.0
    %332 = vmatprep.subr.mxu0 0.0
    %333 = vmatpush2.msra.mxu0 0.0
    %334 = vmatprep.subr.mxu0 0.0
    %335 = vmatpush2.msra.mxu0 0.0
    %336 = vmatprep.subr.mxu0 0.0
    %337 = vmatpush2.msra.mxu0 0.0
    %338 = vmatprep.subr.mxu0 0.0
    %339 = vmatpush2.msra.mxu0 0.0
    %340 = vmatprep.subr.mxu0 0.0
    %341 = vmatpush2.msra.mxu0 0.0
    %342 = vmatprep.subr.mxu0 0.0
    %343 = vmatpush2.msra.mxu0 0.0
    %344 = vmatprep.subr.mxu0 0.0
    %345 = vmatpush2.msra.mxu0 0.0
    %346 = vmatprep.subr.mxu0 0.0
    %347 = vmatpush2.msra.mxu0 0.0
    %348 = vmatprep.subr.mxu0 0.0
    %349 = vmatpush2.msra.mxu0 0.0
    %350 = vmatprep.subr.mxu0 0.0
    %351 = vmatpush2.msra.mxu0 0.0
    %352 = vmatprep.subr.mxu0 0.0
    %353 = vmatpush2.msra.mxu0 0.0
    %354 = vmatprep.subr.mxu0 0.0
    %355 = vmatpush2.msra.mxu0 0.0
    %356 = vmatprep.subr.mxu0 0.0
    %357 = vmatpush2.msra.mxu0 0.0
    %358 = vmatprep.subr.mxu0 0.0
    %359 = vmatpush2.msra.mxu0 0.0
    %360 = vmatprep.subr.mxu0 0.0
    %361 = vmatpush2.msra.mxu0 0.0
    %362 = vmatprep.mubr.f32.mxu0 0.0
    %363 = vmatmul.mubr.f32.gmra.mxu0 %v293
    %v364 = vpop.f32.mrf.mxu0
    %v365 = vadd.f32 %v284, %v364
    %v366 = vpop.f32.mrf.mxu0
    %367 = vmatprep.mubr.f32.mxu0 0.0
    %368 = vmatmul.mubr.f32.gmra.mxu0 %v296
    %v369 = vpop.f32.mrf.mxu0
    %v370 = vadd.f32 %v289, %v369
    %v371 = vpop.f32.mrf.mxu0
    %372 = vdwg.mxu0
    %v373 = vmax.f32 %v365, 0.0
    %v374 = vmax.f32 %v370, 0.0
    %v375 = vld [vmem:[%s7] sm:$0xff]
    %v376 = vld [vmem:[%s7 + $0x8] sm:$0xff]
    %378 = vset.pattern.permute.xlu0 0
    %379 = vperm.xlu0 %378, %v375
    %v380 = vpop.permute.xlu0 %379
    %383 = vset.pattern.permute.xlu0 0
    %384 = vperm.xlu0 %383, %v376
    %v385 = vpop.permute.xlu0 %384
    %v387 = vmul.f32 %v380, %v373
    %v388 = vmul.f32 %v385, %v374
    %vm389 = vcmask 15360
    %v390 = vsel %vm389, %v387, 0.0
    %v391 = vsel %vm389, %v388, 0.0
    %v392 = vadd.f32 %v390, %v391
    %v393 = vrot.slane %v392, 4
    %v394 = vadd.f32 %v392, %v393
    %v395 = vrot.slane %v394, 2
    %v396 = vadd.f32 %v394, %v395
    %v397 = vrot.slane %v396, 1
    %v398 = vadd.f32 %v396, %v397
    %s399 = sld [smem:[#allocation2]]
    %v400 = vstv %s399
    %v401 = vadd.f32 %v398, %v400
    %vm402 = vcmask 8192
    %403 = vst.msk [vmem:[#allocation3] sm:$0x1] %vm402, %v401
    // Predicated region
    $region38: #{tpu_custom_call.1} parent=1 // pred_check
      _
    $region39: #{tpu_custom_call.1} parent=1 // pred_check_branch
      %405 = sbr.rel (0) target = $region41
    $region40: #{tpu_custom_call.1} parent=1 // pred_region
      %s407 = ssub.s32 16, 16
      %408 = vsyncadd [#allocation4], %s407
      %s410 = sshll.u32 [#allocation3], 4
      %s411 = int_to_ptr.vmem [resolvable:$true] %s410
      %413 = dma.vmem_to_hbm [thread:$0]  %s411, 16, %s9, [#allocation4]
    $region41: #{tpu_custom_call.1} parent=1 // pred_fallthru
      _
    // Predicated region
    $region42: #{tpu_custom_call.1} parent=1 // pred_check
      _
    $region43: #{tpu_custom_call.1} parent=1 // pred_check_branch
      %415 = sbr.rel (0) target = $region45
    $region44: #{tpu_custom_call.1} parent=1 // pred_region
      %416 = dma.done [#allocation4], 16
    $region45: #{tpu_custom_call.1} parent=1 // pred_fallthru
      _
    %417 = vsyncpa [#allocation4], 1

</llo_original>
